<compile_context>
chip_gen: v7x
topology: tpu7x:2x2x1
jax: 0.10.0
libtpu: 0.0.40
codegen_flags: <defaults>
</compile_context>

<pallas_src>
import functools

import jax
import jax.numpy as jnp
from jax.experimental import pallas as pl
from jax.experimental.pallas import tpu as pltpu


def _round_up(x: int, m: int) -> int:
    return (x + m - 1) // m * m


def _round_down(x: int, m: int) -> int:
    return (x // m) * m


def _entropy_kernel(x_ref, o_ref, *scratch, rows: int, row_tile: int, d: int,
                    d_chunk: int, num_d_chunks: int, mask_rows: bool,
                    mask_lanes: bool, compute_dtype):
    i = pl.program_id(0)
    k = pl.program_id(1)

    xc = x_ref[...]
    if xc.dtype != compute_dtype:
        xc = xc.astype(compute_dtype)

    # Lane mask for a ragged last D chunk (emitted only when statically needed).
    if mask_lanes:
        lane = jax.lax.broadcasted_iota(jnp.int32, xc.shape, 1)
        valid = (k * d_chunk + lane) < d
        neg = jnp.asarray(jnp.finfo(xc.dtype).min, xc.dtype)
        x_for_max = jnp.where(valid, xc, neg)
    else:
        valid = None
        x_for_max = xc

    # Chunk-local numerically-stable statistics (elementwise chain in compute_dtype,
    # per-row accumulations in f32).
    m_cur_c = jnp.max(x_for_max, axis=-1, keepdims=True)      # (TM, 1)
    z = xc - m_cur_c
    e = jnp.exp(z)
    ez_el = e * z
    if mask_lanes:
        zero = jnp.asarray(0, e.dtype)
        e = jnp.where(valid, e, zero)
        ez_el = jnp.where(valid, ez_el, zero)
    s_cur = jnp.sum(e.astype(jnp.float32), axis=-1, keepdims=True)      # (TM, 1) f32
    ez_cur = jnp.sum(ez_el.astype(jnp.float32), axis=-1, keepdims=True)  # (TM, 1) f32
    m_cur = m_cur_c.astype(jnp.float32)

    def finalize(s, ez):
        # entropy = -sum(p*log p) = log(sum e) - sum(e*z)/sum(e); no (TM, D) prob tensor.
        ent = jnp.log(s) - ez * pl.reciprocal(s, approx=False)
        if mask_rows:
            row_idx = i * row_tile + jax.lax.broadcasted_iota(jnp.int32, ent.shape, 0)
            ent = jnp.where(row_idx < rows, ent, 0.0)
        # Lane-dense per-tile partial sum; final mean happens in the wrapper.
        o_ref[...] = jnp.full(o_ref.shape, jnp.sum(ent), dtype=jnp.float32)

    if num_d_chunks == 1:
        finalize(s_cur, ez_cur)
    else:
        m_sc, s_sc, ez_sc = scratch

        @pl.when(k == 0)
        def _():
            m_sc[...] = m_cur
            s_sc[...] = s_cur
            ez_sc[...] = ez_cur

        @pl.when(k > 0)
        def _():
            m_prev = m_sc[...]
            s_prev = s_sc[...]
            ez_prev = ez_sc[...]
            m_new = jnp.maximum(m_prev, m_cur)
            dm_prev = m_prev - m_new
            dm_cur = m_cur - m_new
            a_prev = jnp.exp(dm_prev)
            a_cur = jnp.exp(dm_cur)
            m_sc[...] = m_new
            s_sc[...] = a_prev * s_prev + a_cur * s_cur
            # sum(e*z) rescaled to the new running max:
            #   e_new = e_old * a,  z_new = z_old + dm   =>   ez_new = a*(ez_old + dm*s_old)
            ez_sc[...] = (a_prev * (ez_prev + dm_prev * s_prev)
                          + a_cur * (ez_cur + dm_cur * s_cur))

        @pl.when(k == num_d_chunks - 1)
        def _():
            finalize(s_sc[...], ez_sc[...])


def _vmem_limit_bytes() -> int:
    """Per-generation scoped-VMEM budget (v7x has 64 MiB physical vs 128 MiB)."""
    try:
        cap = int(pltpu.get_tpu_info().vmem_capacity_bytes)
    except Exception:
        cap = 64 * 1024 * 1024  # conservative (v7x) fallback
    return min(cap // 2, 64 * 1024 * 1024)


def _bf16_compute_ok() -> bool:
    """bf16 VPU/EUP exist on v6e and later; v5e and older would just add converts."""
    try:
        ver = getattr(pltpu.get_tpu_info(), "chip_version", None)
        name = str(ver).lower() if ver is not None else ""
        if not name:
            return False
        for old in ("v2", "v3", "v4", "v5"):
            if old in name:
                return False
        return True
    except Exception:
        return False  # safe default: f32 compute path


def entropy_metric(logits: jax.Array, *, row_tile: int | None = None,
                   d_chunk: int | None = None) -> jax.Array:
    """Mean entropy of softmax(logits) over the last axis. Returns f32 scalar."""
    d = int(logits.shape[-1])
    rows = 1
    for s in logits.shape[:-1]:
        rows *= int(s)
    # Keep the HBM dtype as-is (bf16 stays bf16); any upcast happens inside the kernel.
    x = logits.reshape(rows, d)

    elem_bytes = jnp.dtype(x.dtype).itemsize
    sublane = 8 if elem_bytes >= 4 else (16 if elem_bytes == 2 else 32)
    rows_up = _round_up(rows, sublane)

    vmem_limit = _vmem_limit_bytes()
    budget = (vmem_limit * 4) // 5  # keep ~20% headroom

    # bf16 elementwise chain only for bf16 inputs on bf16-capable VPU/EUP generations.
    compute_dtype = (jnp.bfloat16
                     if (x.dtype == jnp.bfloat16 and _bf16_compute_ok())
                     else jnp.float32)
    comp_bytes = jnp.dtype(compute_dtype).itemsize

    # Footprint model per row, per (lane-padded) lane: double-buffered input plus ~4
    # elementwise temporaries (upcast x / z / e / e*z) that Mosaic may materialize in VMEM.
    per_lane_bytes = 2 * elem_bytes + 4 * comp_bytes
    d_pad = _round_up(d, 128)

    # Decide whether to chunk D (online softmax over a second, "arbitrary" grid axis).
    if d_chunk is None:
        if d <= 128 or budget // (d_pad * per_lane_bytes) >= 256:
            d_chunk = d  # a full-D tile still supports >=256 rows -> no chunking
        else:
            d_chunk = max(128, _round_down(budget // (256 * per_lane_bytes), 128))
            if d_chunk >= d:
                d_chunk = d
    else:
        d_chunk = int(d_chunk)
        if d_chunk >= d:
            d_chunk = d
        else:
            d_chunk = max(128, _round_down(d_chunk, 128))  # keep the lane axis 128-aligned
    num_d = (d + d_chunk - 1) // d_chunk
    mask_lanes = (d % d_chunk) != 0

    lane_pad = _round_up(d_chunk, 128)
    scratch_bytes_per_row = (3 * 128 * 4) if num_d > 1 else 0  # (TM,1) f32 scratch pads lanes
    bytes_per_row = lane_pad * per_lane_bytes + scratch_bytes_per_row

    if row_tile is None:
        row_tile_budget = max(sublane, _round_down(budget // bytes_per_row, sublane))
        # Target >= ~8 grid steps along rows: guarantees DMA/compute overlap and gives both
        # v7x TensorCores a share of the 'parallel' axis (tiles >=512 rows already hit ~85%
        # of HBM roofline, so bigger tiles buy nothing).
        target_steps = 8
        row_tile_target = max(sublane,
                              _round_down(-(-rows_up // target_steps), sublane))
        row_tile = min(row_tile_budget, row_tile_target, rows_up)
        row_tile = max(sublane, _round_down(row_tile, sublane))
        # Light nudge toward an even number of tiles (balanced megacore split on v7x).
        nt0 = -(-rows // row_tile)
        if nt0 > 1 and nt0 % 2 == 1:
            for cand in (row_tile + sublane, row_tile - sublane):
                if sublane <= cand <= min(row_tile_budget, rows_up):
                    if (-(-rows // cand)) % 2 == 0 and (-(-rows // cand)) >= 2:
                        row_tile = cand
                        break
    else:
        row_tile = min(int(row_tile), rows_up)
        row_tile = max(sublane, _round_down(row_tile, sublane))

    num_tiles = -(-rows // row_tile)
    mask_rows = (rows % row_tile) != 0

    scratch_shapes = []
    if num_d > 1:
        scratch_shapes = [pltpu.VMEM((row_tile, 1), jnp.float32)] * 3

    kernel = functools.partial(
        _entropy_kernel, rows=rows, row_tile=row_tile, d=d, d_chunk=d_chunk,
        num_d_chunks=num_d, mask_rows=mask_rows, mask_lanes=mask_lanes,
        compute_dtype=compute_dtype)

    cost = pl.CostEstimate(
        flops=int(5 * rows * d),
        transcendentals=int(rows * d),
        bytes_accessed=int(rows * d * elem_bytes + num_tiles * 8 * 128 * 4))

    # TODO(synk): for very small class counts (D <= 128) a further ~4x lane-efficiency win is
    # available by packing 128//D rows per 128-lane row with a segmented in-kernel reduction.

    partials = pl.pallas_call(
        kernel,
        out_shape=jax.ShapeDtypeStruct((num_tiles, 8, 128), jnp.float32),
        grid_spec=pltpu.PrefetchScalarGridSpec(
            num_scalar_prefetch=0,
            grid=(num_tiles, num_d),
            in_specs=[pl.BlockSpec((row_tile, d_chunk), lambda i, k: (i, k))],
            out_specs=pl.BlockSpec((1, 8, 128), lambda i, k: (i, 0, 0)),
            scratch_shapes=scratch_shapes,
        ),
        compiler_params=pltpu.CompilerParams(
            dimension_semantics=("parallel", "arbitrary"),
            vmem_limit_bytes=vmem_limit,
        ),
        cost_estimate=cost,
    )(x)

    # Every 8x128 entry of a tile's block holds that tile's partial sum -> sum everything
    # (no strided gather) and divide by 1024 * rows for the mean.
    return jnp.sum(partials) / jnp.float32(1024 * rows)


def _entropy_reference(logits: jax.Array) -> jax.Array:
    p = jax.nn.softmax(logits.astype(jnp.float32), axis=-1)
    ent = -jnp.sum(p * jnp.log(p), axis=-1)
    return jnp.mean(ent)


if __name__ == "__main__":
    key = jax.random.PRNGKey(0)
    # batch=2, seq=8, hidden=32 -> logits over 32 classes per position
    logits = jax.random.normal(key, (2, 8, 32), dtype=jnp.float32)
    result = jax.block_until_ready(entropy_metric(logits))
    ref = jax.block_until_ready(_entropy_reference(logits))
    assert jnp.allclose(result, ref, atol=1e-5, rtol=1e-5), (result, ref)

    # Non-divisible row count -> ragged-row masking path.
    logits2 = jax.random.normal(jax.random.PRNGKey(1), (3, 7, 32), dtype=jnp.float32)
    result2 = jax.block_until_ready(entropy_metric(logits2, row_tile=8))
    ref2 = jax.block_until_ready(_entropy_reference(logits2))
    assert jnp.allclose(result2, ref2, atol=1e-5, rtol=1e-5), (result2, ref2)

    # Force the D-chunked online-softmax path (evenly divisible D chunks).
    logits3 = jax.random.normal(jax.random.PRNGKey(2), (2, 8, 384), dtype=jnp.float32)
    result3 = jax.block_until_ready(entropy_metric(logits3, d_chunk=128))
    ref3 = jax.block_until_ready(_entropy_reference(logits3))
    assert jnp.allclose(result3, ref3, atol=1e-5, rtol=1e-5), (result3, ref3)

    # Ragged last D chunk -> in-kernel lane masking path.
    result4 = jax.block_until_ready(entropy_metric(logits3, d_chunk=256))
    assert jnp.allclose(result4, ref3, atol=1e-5, rtol=1e-5), (result4, ref3)

    # TODO(synk): the `preds` (pre-normalized probabilities) input path of the original module
    # would additionally renormalize pk like scipy.stats.entropy; only the logits/softmax path
    # is implemented here.
    print("KERNEL_OK")
</pallas_src>

<mosaic_0001>
module attributes {stable_mosaic.version = 11 : i64} {
  func.func @_entropy_kernel(%arg0: i32, %arg1: i32, %arg2: memref<8x32xf32, #tpu.memory_space<vmem>>, %arg3: memref<1x8x128xf32, #tpu.memory_space<vmem>>) attributes {dimension_semantics = [#tpu.dimension_semantics<parallel>, #tpu.dimension_semantics<arbitrary>], iteration_bounds = array<i64: 2, 1>, scalar_prefetch = 0 : i64, scratch_operands = 0 : i64, tpu.core_type = #tpu.core_type<tc>, window_params = [{transform_indices = @transform_0, window_bounds = array<i64: 8, 32>}, {transform_indices = @transform_1, window_bounds = array<i64: 1, 8, 128>}]} {
    %c0 = arith.constant 0 : index
    %c0_0 = arith.constant 0 : index
    %0 = vector.load %arg2[%c0, %c0_0] : memref<8x32xf32, #tpu.memory_space<vmem>>, vector<8x32xf32>
    %cst = arith.constant dense<0xFF800000> : vector<8xf32>
    %1 = vector.multi_reduction <maximumf>, %0, %cst [1] : vector<8x32xf32> to vector<8xf32>
    %2 = vector.shape_cast %1 : vector<8xf32> to vector<8x1xf32>
    %3 = vector.broadcast %2 : vector<8x1xf32> to vector<8x32xf32>
    %4 = arith.subf %0, %3 : vector<8x32xf32>
    %5 = math.exp %4 : vector<8x32xf32>
    %6 = arith.mulf %5, %4 : vector<8x32xf32>
    %cst_1 = arith.constant dense<0.000000e+00> : vector<8xf32>
    %7 = vector.multi_reduction <add>, %5, %cst_1 [1] : vector<8x32xf32> to vector<8xf32>
    %8 = vector.shape_cast %7 : vector<8xf32> to vector<8x1xf32>
    %cst_2 = arith.constant dense<0.000000e+00> : vector<8xf32>
    %9 = vector.multi_reduction <add>, %6, %cst_2 [1] : vector<8x32xf32> to vector<8xf32>
    %10 = vector.shape_cast %9 : vector<8xf32> to vector<8x1xf32>
    %11 = math.log %8 : vector<8x1xf32>
    %12 = tpu.reciprocal %8 : vector<8x1xf32> -> vector<8x1xf32>
    %13 = arith.mulf %10, %12 : vector<8x1xf32>
    %14 = arith.subf %11, %13 : vector<8x1xf32>
    %15 = vector.shape_cast %14 : vector<8x1xf32> to vector<1x8x1xf32>
    %cst_3 = arith.constant dense<0.000000e+00> : vector<1xf32>
    %16 = vector.multi_reduction <add>, %15, %cst_3 [1, 2] : vector<1x8x1xf32> to vector<1xf32>
    %17 = vector.shape_cast %16 : vector<1xf32> to vector<1x1x1xf32>
    %18 = vector.extract %17[0, 0, 0] : f32 from vector<1x1x1xf32>
    %19 = vector.broadcast %18 : f32 to vector<1x8x128xf32>
    %c0_4 = arith.constant 0 : index
    %c0_5 = arith.constant 0 : index
    %c0_6 = arith.constant 0 : index
    %20 = vector.load %arg3[%c0_4, %c0_5, %c0_6] : memref<1x8x128xf32, #tpu.memory_space<vmem>>, vector<1x8x128xf32>
    tpu.vector_store %arg3[%c0_4, %c0_5, %c0_6], %19 {strides = array<i32>} : memref<1x8x128xf32, #tpu.memory_space<vmem>>, vector<1x8x128xf32>,
    return
  }
  func.func @transform_0(%arg0: i32, %arg1: i32) -> (i32, i32) {
    %c0_i32 = arith.constant 0 : i32
    return %arg0, %arg1 : i32, i32
  }
  func.func @transform_1(%arg0: i32, %arg1: i32) -> (i32, i32, i32) {
    %c0_i32 = arith.constant 0 : i32
    %c0_i32_0 = arith.constant 0 : i32
    %c0_i32_1 = arith.constant 0 : i32
    return %arg0, %c0_i32, %c0_i32_0 : i32, i32, i32
  }
}

</mosaic_0001>

<llo_original>
// kernel: tpu_custom_call.1
$region0: #{tpu_custom_call.1}
  #allocation0 [shape = 'u32[]', space=smem, size = 0x4, offset = 0x4, fixed_abs, tag = 'smem constant byte address 0x4 - core index']
  #allocation1 [shape = 'u32[144,128]{1,0:T(1,128)}', space=vmem, size = 0x12000, scoped, tag = 'internal scratch']
  %s0 = inlined_call_operand.hbm [shape: f32[16,32], index: 0, kind: input, shape index: {}]
  %s1 = inlined_call_operand.hbm [shape: f32[2,8,128], index: 1, kind: output, shape index: {}]
  %s2 = sld [smem:[#allocation0]]
  $region41: #{tpu_custom_call.1} parent=0
    _
  %s4 = ssub.s32 1, %s2
  %s5 = scalar_select 0, %s4, %s2
  $region1: #{tpu_custom_call.1} parent=0
    #allocation2 [shape = 'u8[8192]{0}', space=vmem, size = 0x2000, scoped, tag = 'input window, operand 0']
    #allocation3 [shape = 's32[2]{0}', space=sflag, size = 0x8, scoped, tag = 'scoped memory for tpu_custom_call.1']
    #allocation4 [shape = 's32[2]{0}', space=sflag, size = 0x8, scoped, tag = 'scoped memory for tpu_custom_call.1']
    #allocation5 [shape = 'u8[8192]{0}', space=vmem, size = 0x2000, scoped, tag = 'output window, operand 0']
    %6 = vsyncpa [#allocation3], 0
    %s7 = scalar_lea.sflag [#allocation3], 1
    %8 = vsyncpa %s7, 0
    %9 = vsyncpa [#allocation4], 0
    %s10 = scalar_lea.sflag [#allocation4], 1
    %11 = vsyncpa %s10, 0
    loop: start=0, step=1, limit=4
    $region2: #{tpu_custom_call.1} parent=1 // loop_pre_header
      _
    $region3: #{tpu_custom_call.1} parent=1 // loop_header
      %s13 = sphi 0, %s17
      %p14 = scmp.ge.s32.totalorder %s13, 4
      %s20 = sphi 0, %s32
      %s21 = sphi 0, %s28
      %s22 = sphi 0, %s20
      %s23 = sphi 0, %s21
      %s24 = sphi 0, %s22
      %s25 = sphi 0, %s23
      %s37 = sphi 0, %s39
      %s40 = sphi 0, %s37
      %s41 = sphi 0, %s40
      %s57 = sphi 0, %s41
      %s63 = sphi 0, %s65
      %s66 = sphi 0, %s63
      %s67 = sphi 0, %s66
      %s83 = sphi 0, %s67
    $region4: #{tpu_custom_call.1} parent=1 // loop_header_branch
      %16 = sbr.rel (%p14) target = $region8
    $region5: #{tpu_custom_call.1} parent=1 // loop_body
      %s18 = ssub.s32 %s13, 1
      %s19 = ssub.s32 %s13, 2
      %s26 = sadd.s32 1, %s21
      %p27 = scmp.ge.s32.totalorder %s26, 1
      %s28 = scalar_select %p27, 0, %s26
      %s29 = sadd.s32 1, %s20
      %s30 = scalar_select %p27, %s29, %s20
      %p31 = scmp.ge.s32.totalorder %s30, 2
      %s32 = scalar_select %p31, 0, %s30
      %s33 = ssub.s32 %s20, %s32
      %s34 = ssub.s32 %s21, %s28
      %s35 = sor.u32 %s33, %s34
      %p36 = scmp.eq.s32.totalorder %s35, 0
      %s38 = sadd.s32 %s37, 1
      %s39 = scalar_select %p36, %s37, %s38
      %p42 = pneg %p36
      %p43 = scmp.eq.s32.totalorder %s13, 1
      %p44 = por %p42, %p43
      %p45 = scmp.ne.s32.totalorder %s37, %s40
      %p46 = scmp.eq.s32.totalorder %s13, 0
      %p47 = por %p45, %p46
      %p48 = scmp.ne.s32.totalorder %s37, %s40
      %p49 = scmp.eq.s32.totalorder %s18, 1
      %p50 = por %p48, %p49
      %p51 = scmp.ne.s32.totalorder %s40, %s41
      %p52 = scmp.eq.s32.totalorder %s18, 0
      %p53 = por %p51, %p52
      %p54 = scmp.ne.s32.totalorder %s40, %s41
      %p55 = scmp.eq.s32.totalorder %s19, 1
      %p56 = por %p54, %p55
      %p58 = scmp.ne.s32.totalorder %s41, %s57
      %p59 = scmp.eq.s32.totalorder %s19, 0
      %p60 = por %p58, %p59
      %s61 = ssub.s32 %s20, %s32
      %p62 = scmp.eq.s32.totalorder %s61, 0
      %s64 = sadd.s32 %s63, 1
      %s65 = scalar_select %p62, %s63, %s64
      %p68 = pneg %p62
      %p69 = scmp.eq.s32.totalorder %s13, 1
      %p70 = por %p68, %p69
      %p71 = scmp.ne.s32.totalorder %s63, %s66
      %p72 = scmp.eq.s32.totalorder %s13, 0
      %p73 = por %p71, %p72
      %p74 = scmp.ne.s32.totalorder %s63, %s66
      %p75 = scmp.eq.s32.totalorder %s18, 1
      %p76 = por %p74, %p75
      %p77 = scmp.ne.s32.totalorder %s66, %s67
      %p78 = scmp.eq.s32.totalorder %s18, 0
      %p79 = por %p77, %p78
      %p80 = scmp.ne.s32.totalorder %s66, %s67
      %p81 = scmp.eq.s32.totalorder %s19, 1
      %p82 = por %p80, %p81
      %p84 = scmp.ne.s32.totalorder %s67, %s83
      %p85 = scmp.eq.s32.totalorder %s19, 0
      %p86 = por %p84, %p85
      %p87 = scmp.le.s32.totalorder 1, %s13
      %p88 = scmp.lt.s32.totalorder %s13, 3
      %p89 = pnand %p87, %p88
      %p90 = pneg %p89
      // Predicated region
      $region9: #{tpu_custom_call.1} parent=5 // pred_check
        _
      $region10: #{tpu_custom_call.1} parent=5 // pred_check_branch
        %92 = sbr.rel (%p89) target = $region12
      $region11: #{tpu_custom_call.1} parent=5 // pred_region
        %s93 = ssub.s32 %s13, 1
      $region12: #{tpu_custom_call.1} parent=5 // pred_fallthru
        _
      %p94 = scmp.lt.s32.totalorder %s13, 2
      // Predicated region
      $region13: #{tpu_custom_call.1} parent=5 // pred_check
        %p95 = pneg %p94
      $region14: #{tpu_custom_call.1} parent=5 // pred_check_branch
        %97 = sbr.rel (%p95) target = $region16
      $region15: #{tpu_custom_call.1} parent=5 // pred_region
        // Predicated region
        $region17: #{tpu_custom_call.1} parent=15 // pred_check
          %p98 = pneg %p47
        $region18: #{tpu_custom_call.1} parent=15 // pred_check_branch
          %100 = sbr.rel (%p98) target = $region20
        $region19: #{tpu_custom_call.1} parent=15 // pred_region
          %s101 = sand.u32 %s37, 1
          %s102 = scalar_lea.sflag [#allocation3], %s101
          %s103 = sand.u32 %s37, 1
          %s104 = smul.addr %s103, 8
          %s105 = scalar_lea.vmem [#allocation2], %s104
          %s107 = ssub.s32 128, 128
          %108 = vsyncadd %s102, %s107
          %s109 = sadd.s32 %s21, %s20
          %s110 = smul.addr %s109, 128
          %s111 = scalar_lea.hbm %s0, %s110
          %s113 = sshll.u32 %s105, 4
          %s114 = int_to_ptr.vmem [resolvable:$true] %s113
          %116 = dma.hbm_to_vmem [thread:$0]  %s111, 128, %s114, %s102
        $region20: #{tpu_custom_call.1} parent=15 // pred_fallthru
          _
      $region16: #{tpu_custom_call.1} parent=5 // pred_fallthru
        _
      %p117 = scmp.le.s32.totalorder 1, %s13
      %p118 = scmp.lt.s32.totalorder %s13, 3
      %p119 = pnand %p117, %p118
      %p120 = pneg %p119
      // Predicated region
      $region21: #{tpu_custom_call.1} parent=5 // pred_check
        _
      $region22: #{tpu_custom_call.1} parent=5 // pred_check_branch
        %122 = sbr.rel (%p119) target = $region24
      $region23: #{tpu_custom_call.1} parent=5 // pred_region
        %s123 = ssub.s32 %s13, 1
        %s124 = sand.u32 %s40, 1
        %s125 = scalar_lea.sflag [#allocation3], %s124
        %s126 = sand.u32 %s40, 1
        %s127 = smul.addr %s126, 8
        %s128 = scalar_lea.vmem [#allocation2], %s127
        // Predicated region
        $region25: #{tpu_custom_call.1} parent=23 // pred_check
          %p129 = pneg %p53
        $region26: #{tpu_custom_call.1} parent=23 // pred_check_branch
          %131 = sbr.rel (%p129) target = $region28
        $region27: #{tpu_custom_call.1} parent=23 // pred_region
          %132 = dma.done %s125, 128
        $region28: #{tpu_custom_call.1} parent=23 // pred_fallthru
          _
        %s133 = sand.u32 %s40, 1
        %s134 = scalar_lea.sflag [#allocation3], %s133
        %s135 = sand.u32 %s40, 1
        %s136 = smul.addr %s135, 8
        %s137 = scalar_lea.vmem [#allocation2], %s136
        %p138 = pneg %p53
        %p139 = pneg %p50
        %p140 = pneg %p79
        %p141 = pneg %p76
        %s142 = sand.u32 %s66, 1
        %s143 = scalar_lea.sflag [#allocation4], %s142
        %s144 = sand.u32 %s66, 1
        %s145 = smul.addr %s144, 8
        %s146 = scalar_lea.vmem [#allocation5], %s145
        %v147 = vld [vmem:[%s128] sm:$0xff]
        %vm148 = vcmask 261120
        %v149 = vsel %vm148, %v147, -inf
        %150 = vmax.xlane.f32.xlu0 %v149
        %v151 = vpop.xlane.xlu0 %150
        %v152 = vsub.f32 %v147, %v151
        %v153 = vmul.f32 %v152, 1.442695
        %v154 = vpow.pop %v153
        %v155 = vmul.f32 %v154, %v152
        %v156 = vsel %vm148, %v154, 0.0
        %157 = vadd.xlane.f32.xlu0 %v156
        %v158 = vpop.xlane.xlu0 %157
        %v159 = vsel %vm148, %v155, 0.0
        %160 = vadd.xlane.f32.xlu0 %v159
        %v161 = vpop.xlane.xlu0 %160
        %v162 = vlog2.pop %v158
        %v163 = vmul.f32 %v162, 0.6931472
        %v164 = vrcp.pop %v158
        %v165 = vmul.f32 %v161, %v164
        %v166 = vsub.f32 %v163, %v165
        %vm167 = vcmask 7168
        %v168 = vsel %vm167, %v166, 0.0
        %169 = vadd.xlane.f32.xlu0 %v168
        %v170 = vpop.xlane.xlu0 %169
        %v171 = vrot.slane %v170, 4
        %v172 = vadd.f32 %v170, %v171
        %v173 = vrot.slane %v172, 2
        %v174 = vadd.f32 %v172, %v173
        %v175 = vrot.slane %v174, 1
        %v176 = vadd.f32 %v174, %v175
        %s177 = vtos %v176
        %v178 = vstv %s177
        %179 = vst [vmem:[%s146] sm:$0xff] %v178
        %s180 = sand.u32 %s66, 1
        %s181 = scalar_lea.sflag [#allocation4], %s180
        %s182 = sand.u32 %s66, 1
        %s183 = smul.addr %s182, 8
        %s184 = scalar_lea.vmem [#allocation5], %s183
        // Predicated region
        $region29: #{tpu_custom_call.1} parent=23 // pred_check
          %p185 = pneg %p76
        $region30: #{tpu_custom_call.1} parent=23 // pred_check_branch
          %187 = sbr.rel (%p185) target = $region32
        $region31: #{tpu_custom_call.1} parent=23 // pred_region
          %s189 = ssub.s32 128, 128
          %190 = vsyncadd %s181, %s189
          %s191 = smul.addr %s22, 128
          %s192 = scalar_lea.hbm %s1, %s191
          %s194 = sshll.u32 %s184, 4
          %s195 = int_to_ptr.vmem [resolvable:$true] %s194
          %197 = dma.vmem_to_hbm [thread:$0]  %s195, 128, %s192, %s181
        $region32: #{tpu_custom_call.1} parent=23 // pred_fallthru
          _
      $region24: #{tpu_custom_call.1} parent=5 // pred_fallthru
        _
      %p198 = scmp.le.s32.totalorder 2, %s13
      // Predicated region
      $region33: #{tpu_custom_call.1} parent=5 // pred_check
        %p199 = pneg %p198
      $region34: #{tpu_custom_call.1} parent=5 // pred_check_branch
        %201 = sbr.rel (%p199) target = $region36
      $region35: #{tpu_custom_call.1} parent=5 // pred_region
        %s202 = ssub.s32 %s13, 2
        // Predicated region
        $region37: #{tpu_custom_call.1} parent=35 // pred_check
          %p203 = pneg %p82
        $region38: #{tpu_custom_call.1} parent=35 // pred_check_branch
          %205 = sbr.rel (%p203) target = $region40
        $region39: #{tpu_custom_call.1} parent=35 // pred_region
          %s206 = sand.u32 %s67, 1
          %s207 = scalar_lea.sflag [#allocation4], %s206
          %s208 = sand.u32 %s67, 1
          %s209 = smul.addr %s208, 8
          %s210 = scalar_lea.vmem [#allocation5], %s209
          %211 = dma.done %s207, 128
        $region40: #{tpu_custom_call.1} parent=35 // pred_fallthru
          _
      $region36: #{tpu_custom_call.1} parent=5 // pred_fallthru
        _
    $region6: #{tpu_custom_call.1} parent=1 // loop_footer
      %s17 = sadd.s32 1, %s13
    $region7: #{tpu_custom_call.1} parent=1 // loop_footer_branch
      %12 = sbr.rel target = $region3
    $region8: #{tpu_custom_call.1} parent=1 // loop_exit
      _
    %212 = vsyncpa [#allocation3], 1
    %s213 = scalar_lea.sflag [#allocation3], 1
    %214 = vsyncpa %s213, 1
    %215 = vsyncpa [#allocation4], 1
    %s216 = scalar_lea.sflag [#allocation4], 1
    %217 = vsyncpa %s216, 1

</llo_original>
